<compile_context>
chip_gen: v7x
topology: tpu7x:2x2x1
jax: 0.10.0
libtpu: 0.0.40
codegen_flags: <defaults>
</compile_context>

<pallas_src>
import functools
import math

import jax
import jax.numpy as jnp
from jax import lax
from jax.experimental import pallas as pl
from jax.experimental.pallas import tpu as pltpu

_SUBLANE = 8
# Byte target for the input block: ~4 MiB keeps per-step grid overhead (~0.35 us)
# well under 10% of the per-step HBM time on every generation.
_TARGET_BLOCK_BYTES = 4 * 1024 * 1024


def _layernorm_kernel(x_ref, w_ref, b_ref, o_ref, *, eps, inv_h):
    x = x_ref[...].astype(jnp.float32)                      # (tile_rows, hidden)
    # Single-sweep statistics: var = E[x^2] - mean^2.  Saves one full elementwise
    # pass over x and one tile-sized f32 temporary vs. the two-pass form.  f32
    # accumulation throughout; the clamp guards the (pathological large-mean)
    # cancellation case from producing a negative variance.
    sx = jnp.sum(x, axis=-1, keepdims=True)
    sxx = jnp.sum(x * x, axis=-1, keepdims=True)
    u = sx * jnp.float32(inv_h)
    var = jnp.maximum(sxx * jnp.float32(inv_h) - u * u, 0.0)
    inv = lax.rsqrt(var + jnp.float32(eps))                 # EUP slot: effectively free
    y = (x - u) * inv
    # weight/bias are pre-cast to f32 in the wrapper -> no per-tile cast here.
    o_ref[...] = (w_ref[...] * y + b_ref[...]).astype(o_ref.dtype)


def _vmem_budget_and_limit():
    """Generation-aware (pipeline budget, vmem_limit_bytes)."""
    try:
        info = pltpu.get_tpu_info()
        cap = getattr(info, "vmem_capacity_bytes", None)
    except Exception:  # pragma: no cover - conservative fallback off-TPU / old jax
        cap = None
    if cap is not None and cap >= 96 * 1024 * 1024:
        # v5e / v6e: 128 MiB physical VMEM -> large blocks, generous limit.
        return 28 * 1024 * 1024, 64 * 1024 * 1024
    if cap is not None:
        # v7x: 64 MiB per TensorCore -> stay conservative, leave compiler headroom.
        return 16 * 1024 * 1024, 48 * 1024 * 1024
    # Unknown generation: defaults safe everywhere.
    return 12 * 1024 * 1024, 32 * 1024 * 1024


def _pick_row_tile(rows, hidden, in_bytes, out_bytes, vmem_budget):
    """Largest sublane-aligned row tile that is byte-targeted and VMEM-safe."""
    # Live bytes per tile row: double-buffered input, double-buffered output, plus
    # ~12 B/elem of f32 working set inside the kernel (x_f32, centered copy, result
    # before the store cast).  The previous '+4' estimate under-counted by ~2x.
    per_row = hidden * (2 * in_bytes + 2 * out_bytes + 12)
    tile_by_vmem = vmem_budget // max(per_row, 1)
    tile_by_bytes = _TARGET_BLOCK_BYTES // max(hidden * in_bytes, 1)
    tile = min(tile_by_vmem, tile_by_bytes)
    if tile >= rows:
        return rows                      # single block == full rows dim: always legal
    return max(_SUBLANE, (tile // _SUBLANE) * _SUBLANE)


def layer_norm(x, weight, bias, eps=1e-12, row_tile=None):
    """x: (..., hidden); weight, bias: (hidden,). Returns same shape/dtype as x."""
    orig_shape = x.shape
    hidden = orig_shape[-1]
    rows = math.prod(orig_shape[:-1])
    x2 = x.reshape(rows, hidden)
    # weight/bias: tiny, pre-cast to f32 once so the kernel does no per-tile casts.
    w2 = weight.astype(jnp.float32).reshape(1, hidden)
    b2 = bias.astype(jnp.float32).reshape(1, hidden)

    budget, vmem_limit = _vmem_budget_and_limit()
    if row_tile is None:
        tile = _pick_row_tile(rows, hidden, x2.dtype.itemsize, x.dtype.itemsize, budget)
    else:
        tile = int(row_tile)
        tile = rows if tile >= rows else max(_SUBLANE, (tile // _SUBLANE) * _SUBLANE)

    grid_rows = pl.cdiv(rows, tile)
    kernel = functools.partial(_layernorm_kernel, eps=float(eps), inv_h=1.0 / hidden)

    out = pl.pallas_call(
        kernel,
        out_shape=jax.ShapeDtypeStruct((rows, hidden), x.dtype),
        grid=(grid_rows,),
        in_specs=[
            # Row tile; hidden is a full-dim lane block (legal even if hidden % 128 != 0),
            # so there is no wrapper-side pad or post-kernel slice.
            pl.BlockSpec((tile, hidden), lambda i: (i, 0)),
            pl.BlockSpec((1, hidden), lambda i: (0, 0)),      # weight (constant block)
            pl.BlockSpec((1, hidden), lambda i: (0, 0)),      # bias   (constant block)
        ],
        out_specs=pl.BlockSpec((tile, hidden), lambda i: (i, 0)),
        compiler_params=pltpu.CompilerParams(
            dimension_semantics=("parallel",),   # rows may shard across v7x's 2 TCs
            vmem_limit_bytes=vmem_limit,
        ),
    )(x2, w2, b2)

    return out.reshape(orig_shape)


def _reference(x, weight, bias, eps):
    u = jnp.mean(x, axis=-1, keepdims=True)
    s = jnp.mean((x - u) ** 2, axis=-1, keepdims=True)
    return weight * ((x - u) / jnp.sqrt(s + eps)) + bias


if __name__ == "__main__":
    key = jax.random.PRNGKey(0)

    # --- primary check: shapes implied by the module (hidden=32) ---
    batch, seq, hidden = 2, 8, 32
    x = jax.random.normal(key, (batch, seq, hidden), dtype=jnp.float32)
    weight = jnp.ones((hidden,), dtype=jnp.float32)   # nn.Parameter(torch.ones(hidden))
    bias = jnp.zeros((hidden,), dtype=jnp.float32)    # nn.Parameter(torch.zeros(hidden))

    y = jax.block_until_ready(layer_norm(x, weight, bias, eps=1e-12))
    ref = _reference(x, weight, bias, 1e-12)
    assert jnp.allclose(y, ref, atol=1e-5, rtol=1e-5), "mismatch vs reference (primary)"

    # --- non-trivial weight/bias, rows not divisible by tile, hidden % 128 != 0:
    #     exercises the no-padding boundary-block path end to end ---
    k1, k2, k3 = jax.random.split(jax.random.PRNGKey(1), 3)
    h2 = 96
    x2 = jax.random.normal(k1, (2, 100, h2), dtype=jnp.float32)   # rows = 200
    w2 = jax.random.normal(k2, (h2,), dtype=jnp.float32)
    b2 = jax.random.normal(k3, (h2,), dtype=jnp.float32)
    y2 = jax.block_until_ready(layer_norm(x2, w2, b2, eps=1e-12, row_tile=64))
    assert jnp.allclose(y2, _reference(x2, w2, b2, 1e-12),
                        atol=1e-5, rtol=1e-5), "mismatch vs reference (boundary block)"

    # --- lane-aligned hidden + multi-step grid ---
    h3 = 128
    x3 = jax.random.normal(jax.random.PRNGKey(2), (4, 64, h3), dtype=jnp.float32)
    w3 = jnp.full((h3,), 0.5, dtype=jnp.float32)
    b3 = jnp.full((h3,), -1.0, dtype=jnp.float32)
    y3 = jax.block_until_ready(layer_norm(x3, w3, b3, eps=1e-12, row_tile=64))
    assert jnp.allclose(y3, _reference(x3, w3, b3, 1e-12),
                        atol=1e-5, rtol=1e-5), "mismatch vs reference (multi-step grid)"

    print("KERNEL_OK")
</pallas_src>

<mosaic_0001>
module attributes {stable_mosaic.version = 11 : i64} {
  func.func @_layernorm_kernel(%arg0: i32, %arg1: memref<16x32xf32, #tpu.memory_space<vmem>>, %arg2: memref<1x32xf32, #tpu.memory_space<vmem>>, %arg3: memref<1x32xf32, #tpu.memory_space<vmem>>, %arg4: memref<16x32xf32, #tpu.memory_space<vmem>>) attributes {dimension_semantics = [#tpu.dimension_semantics<parallel>], iteration_bounds = array<i64: 1>, scalar_prefetch = 0 : i64, scratch_operands = 0 : i64, tpu.core_type = #tpu.core_type<tc>, window_params = [{transform_indices = @transform_0, window_bounds = array<i64: 16, 32>}, {pipeline_mode = #tpu.pipeline_mode<synchronous>, transform_indices = @transform_1, window_bounds = array<i64: 1, 32>}, {pipeline_mode = #tpu.pipeline_mode<synchronous>, transform_indices = @transform_2, window_bounds = array<i64: 1, 32>}, {transform_indices = @transform_3, window_bounds = array<i64: 16, 32>}]} {
    %c0 = arith.constant 0 : index
    %c0_0 = arith.constant 0 : index
    %0 = vector.load %arg1[%c0, %c0_0] : memref<16x32xf32, #tpu.memory_space<vmem>>, vector<16x32xf32>
    %cst = arith.constant dense<0.000000e+00> : vector<16xf32>
    %1 = vector.multi_reduction <add>, %0, %cst [1] : vector<16x32xf32> to vector<16xf32>
    %2 = vector.shape_cast %1 : vector<16xf32> to vector<16x1xf32>
    %3 = arith.mulf %0, %0 : vector<16x32xf32>
    %cst_1 = arith.constant dense<0.000000e+00> : vector<16xf32>
    %4 = vector.multi_reduction <add>, %3, %cst_1 [1] : vector<16x32xf32> to vector<16xf32>
    %5 = vector.shape_cast %4 : vector<16xf32> to vector<16x1xf32>
    %cst_2 = arith.constant 3.125000e-02 : f32
    %6 = vector.broadcast %cst_2 : f32 to vector<16x1xf32>
    %7 = arith.mulf %2, %6 : vector<16x1xf32>
    %cst_3 = arith.constant 3.125000e-02 : f32
    %8 = vector.broadcast %cst_3 : f32 to vector<16x1xf32>
    %9 = arith.mulf %5, %8 : vector<16x1xf32>
    %10 = arith.mulf %7, %7 : vector<16x1xf32>
    %11 = arith.subf %9, %10 : vector<16x1xf32>
    %cst_4 = arith.constant 0.000000e+00 : f32
    %12 = vector.broadcast %cst_4 : f32 to vector<16x1xf32>
    %13 = arith.maximumf %11, %12 : vector<16x1xf32>
    %cst_5 = arith.constant 9.99999996E-13 : f32
    %14 = vector.broadcast %cst_5 : f32 to vector<16x1xf32>
    %15 = arith.addf %13, %14 : vector<16x1xf32>
    %16 = math.rsqrt %15 : vector<16x1xf32>
    %17 = vector.broadcast %7 : vector<16x1xf32> to vector<16x32xf32>
    %18 = arith.subf %0, %17 : vector<16x32xf32>
    %19 = vector.broadcast %16 : vector<16x1xf32> to vector<16x32xf32>
    %20 = arith.mulf %18, %19 : vector<16x32xf32>
    %c0_6 = arith.constant 0 : index
    %c0_7 = arith.constant 0 : index
    %21 = vector.load %arg2[%c0_6, %c0_7] : memref<1x32xf32, #tpu.memory_space<vmem>>, vector<1x32xf32>
    %22 = vector.broadcast %21 : vector<1x32xf32> to vector<16x32xf32>
    %23 = arith.mulf %22, %20 : vector<16x32xf32>
    %c0_8 = arith.constant 0 : index
    %c0_9 = arith.constant 0 : index
    %24 = vector.load %arg3[%c0_8, %c0_9] : memref<1x32xf32, #tpu.memory_space<vmem>>, vector<1x32xf32>
    %25 = vector.broadcast %24 : vector<1x32xf32> to vector<16x32xf32>
    %26 = arith.addf %23, %25 : vector<16x32xf32>
    %c0_10 = arith.constant 0 : index
    %c0_11 = arith.constant 0 : index
    %27 = vector.load %arg4[%c0_10, %c0_11] : memref<16x32xf32, #tpu.memory_space<vmem>>, vector<16x32xf32>
    tpu.vector_store %arg4[%c0_10, %c0_11], %26 {strides = array<i32>} : memref<16x32xf32, #tpu.memory_space<vmem>>, vector<16x32xf32>,
    return
  }
  func.func @transform_0(%arg0: i32) -> (i32, i32) {
    %c0_i32 = arith.constant 0 : i32
    %c0_i32_0 = arith.constant 0 : i32
    return %arg0, %c0_i32 : i32, i32
  }
  func.func @transform_1(%arg0: i32) -> (i32, i32) {
    %c0_i32 = arith.constant 0 : i32
    %c0_i32_0 = arith.constant 0 : i32
    %c0_i32_1 = arith.constant 0 : i32
    return %c0_i32, %c0_i32_0 : i32, i32
  }
  func.func @transform_2(%arg0: i32) -> (i32, i32) {
    %c0_i32 = arith.constant 0 : i32
    %c0_i32_0 = arith.constant 0 : i32
    %c0_i32_1 = arith.constant 0 : i32
    return %c0_i32, %c0_i32_0 : i32, i32
  }
  func.func @transform_3(%arg0: i32) -> (i32, i32) {
    %c0_i32 = arith.constant 0 : i32
    %c0_i32_0 = arith.constant 0 : i32
    return %arg0, %c0_i32 : i32, i32
  }
}

</mosaic_0001>

<llo_original>
// kernel: tpu_custom_call.1
$region0: #{tpu_custom_call.1}
  #allocation0 [shape = 'u32[]', space=smem, size = 0x4, offset = 0x4, fixed_abs, tag = 'smem constant byte address 0x4 - core index']
  #allocation1 [shape = 'u32[144,128]{1,0:T(1,128)}', space=vmem, size = 0x12000, scoped, tag = 'internal scratch']
  %s0 = inlined_call_operand.hbm [shape: f32[16,32], index: 0, kind: input, shape index: {}]
  %s1 = inlined_call_operand.vmem [shape: f32[1,32], index: 1, kind: input, shape index: {}]
  %s2 = inlined_call_operand.vmem [shape: f32[1,32], index: 2, kind: input, shape index: {}]
  %s3 = inlined_call_operand.hbm [shape: f32[16,32], index: 3, kind: output, shape index: {}]
  %s4 = sld [smem:[#allocation0]]
  $region26: #{tpu_custom_call.1} parent=0
    _
  %s6 = ssub.s32 1, %s4
  %s7 = scalar_select 0, %s6, %s4
  $region1: #{tpu_custom_call.1} parent=0
    #allocation2 [shape = 'u8[8192]{0}', space=vmem, size = 0x2000, scoped, tag = 'input window, operand 0, single buffered']
    #allocation3 [shape = 's32[1]{0}', space=sflag, size = 0x4, scoped, tag = 'scoped memory for tpu_custom_call.1']
    #allocation4 [shape = 's32[1]{0}', space=sflag, size = 0x4, scoped, tag = 'scoped memory for tpu_custom_call.1']
    #allocation5 [shape = 'u8[8192]{0}', space=vmem, size = 0x2000, scoped, tag = 'output window, operand 0, single buffered']
    %8 = vsyncpa [#allocation3], 0
    %9 = vsyncpa [#allocation4], 0
    // Predicated region
    $region2: #{tpu_custom_call.1} parent=1 // pred_check
      _
    $region3: #{tpu_custom_call.1} parent=1 // pred_check_branch
      %11 = sbr.rel (0) target = $region5
    $region4: #{tpu_custom_call.1} parent=1 // pred_region
      %s13 = ssub.s32 256, 256
      %14 = vsyncadd [#allocation3], %s13
      %s15 = sshll.u32 [#allocation2], 4
      %s16 = int_to_ptr.vmem [resolvable:$true] %s15
      %21 = dma.hbm_to_vmem [thread:$0]  %s0, 256, %s16, [#allocation3], 128, 128, 8
    $region5: #{tpu_custom_call.1} parent=1 // pred_fallthru
      _
    // Predicated region
    $region6: #{tpu_custom_call.1} parent=1 // pred_check
      _
    $region7: #{tpu_custom_call.1} parent=1 // pred_check_branch
      %23 = sbr.rel (0) target = $region9
    $region8: #{tpu_custom_call.1} parent=1 // pred_region
      _
    $region9: #{tpu_custom_call.1} parent=1 // pred_fallthru
      _
    // Predicated region
    $region10: #{tpu_custom_call.1} parent=1 // pred_check
      _
    $region11: #{tpu_custom_call.1} parent=1 // pred_check_branch
      %25 = sbr.rel (0) target = $region13
    $region12: #{tpu_custom_call.1} parent=1 // pred_region
      _
    $region13: #{tpu_custom_call.1} parent=1 // pred_fallthru
      _
    // Predicated region
    $region14: #{tpu_custom_call.1} parent=1 // pred_check
      _
    $region15: #{tpu_custom_call.1} parent=1 // pred_check_branch
      %27 = sbr.rel (0) target = $region17
    $region16: #{tpu_custom_call.1} parent=1 // pred_region
      %28 = dma.done [#allocation3], 256
    $region17: #{tpu_custom_call.1} parent=1 // pred_fallthru
      _
    %v29 = vld [vmem:[#allocation2] sm:$0xff]
    %v30 = vld [vmem:[#allocation2 + $0x8] sm:$0xff]
    %vm31 = vcmask 261120
    %v32 = vsel %vm31, %v29, 0.0
    %33 = vadd.xlane.f32.xlu0 %v32
    %v34 = vpop.xlane.xlu0 %33
    %v35 = vsel %vm31, %v30, 0.0
    %36 = vadd.xlane.f32.xlu0 %v35
    %v37 = vpop.xlane.xlu0 %36
    %v38 = vmul.f32 %v29, %v29
    %v39 = vmul.f32 %v30, %v30
    %v40 = vsel %vm31, %v38, 0.0
    %41 = vadd.xlane.f32.xlu0 %v40
    %v42 = vpop.xlane.xlu0 %41
    %v43 = vsel %vm31, %v39, 0.0
    %44 = vadd.xlane.f32.xlu0 %v43
    %v45 = vpop.xlane.xlu0 %44
    %v46 = vmul.f32 %v34, 0.03125
    %v47 = vmul.f32 %v37, 0.03125
    %v48 = vmul.f32 %v42, 0.03125
    %v49 = vmul.f32 %v45, 0.03125
    %v50 = vmul.f32 %v46, %v46
    %v51 = vmul.f32 %v47, %v47
    %v52 = vsub.f32 %v48, %v50
    %v53 = vsub.f32 %v49, %v51
    %v54 = vmax.f32 %v52, 0.0
    %v55 = vmax.f32 %v53, 0.0
    %v56 = vadd.f32 %v54, 1e-12
    %v57 = vadd.f32 %v55, 1e-12
    %v58 = vrsqrt.pop %v56
    %v59 = vrsqrt.pop %v57
    %v60 = vsub.f32 %v29, %v46
    %v61 = vsub.f32 %v30, %v47
    %v62 = vmul.f32 %v60, %v58
    %v63 = vmul.f32 %v61, %v59
    %v64 = vld [vmem:[%s1] sm:$0x1]
    %v66 = vlaneseq
    %v67 = vshrl.u32 %v66, 7
    %v68 = vsub.s32 0, %v67
    %v69 = vrot.slane %v64, %v68
    %v71 = vmul.f32 %v69, %v62
    %v72 = vmul.f32 %v69, %v63
    %v73 = vld [vmem:[%s2] sm:$0x1]
    %v75 = vlaneseq
    %v76 = vshrl.u32 %v75, 7
    %v77 = vsub.s32 0, %v76
    %v78 = vrot.slane %v73, %v77
    %v80 = vadd.f32 %v71, %v78
    %v81 = vadd.f32 %v72, %v78
    %82 = vst.msk [vmem:[#allocation5] sm:$0xff] %vm31, %v80
    %83 = vst.msk [vmem:[#allocation5 + $0x8] sm:$0xff] %vm31, %v81
    // Predicated region
    $region18: #{tpu_custom_call.1} parent=1 // pred_check
      _
    $region19: #{tpu_custom_call.1} parent=1 // pred_check_branch
      %85 = sbr.rel (0) target = $region21
    $region20: #{tpu_custom_call.1} parent=1 // pred_region
      %s87 = ssub.s32 256, 256
      %88 = vsyncadd [#allocation4], %s87
      %s89 = sshll.u32 [#allocation5], 4
      %s90 = int_to_ptr.vmem [resolvable:$true] %s89
      %95 = dma.vmem_to_hbm [thread:$0]  %s90, 256, %s3, [#allocation4], 128, 128, 8
    $region21: #{tpu_custom_call.1} parent=1 // pred_fallthru
      _
    // Predicated region
    $region22: #{tpu_custom_call.1} parent=1 // pred_check
      _
    $region23: #{tpu_custom_call.1} parent=1 // pred_check_branch
      %97 = sbr.rel (0) target = $region25
    $region24: #{tpu_custom_call.1} parent=1 // pred_region
      %98 = dma.done [#allocation4], 256
    $region25: #{tpu_custom_call.1} parent=1 // pred_fallthru
      _
    %99 = vsyncpa [#allocation3], 1
    %100 = vsyncpa [#allocation4], 1

</llo_original>
